<compile_context>
chip_gen: v7x
topology: tpu7x:2x2x1
jax: 0.10.0
libtpu: 0.0.40
codegen_flags: <defaults>
</compile_context>

<pallas_src>
import functools
import math

import jax
import jax.numpy as jnp
from jax import lax
from jax.experimental import pallas as pl
from jax.experimental.pallas import tpu as pltpu

_HIGHEST = lax.Precision.HIGHEST


def _pick_tile(n, candidates=(1024, 512, 256, 128)):
    """Largest lane tile (multiple of 128) dividing n, else the full extent."""
    for c in candidates:
        if n >= c and n % c == 0:
            return c
    return n


# ----------------------------------------------------------------------------
# Kernel 1: batched 1x1 convolution as a matmul
#   x: (bs, Cin, N) tiled over (batch, N); w,b resident.
# ----------------------------------------------------------------------------
def _conv1x1_kernel(x_ref, w_ref, b_ref, o_ref):
    o_ref[0] = (
        jnp.dot(w_ref[...], x_ref[0],
                preferred_element_type=jnp.float32, precision=_HIGHEST)
        + b_ref[...]
    )


def conv1x1(x, w, b):
    bs, cin, n = x.shape
    cout = w.shape[0]
    nt = _pick_tile(n)
    return pl.pallas_call(
        _conv1x1_kernel,
        out_shape=jax.ShapeDtypeStruct((bs, cout, n), jnp.float32),
        grid=(bs, n // nt),
        in_specs=[
            pl.BlockSpec((1, cin, nt), lambda b_, j: (b_, 0, j)),
            pl.BlockSpec((cout, cin), lambda b_, j: (0, 0)),
            pl.BlockSpec((cout, 1), lambda b_, j: (0, 0)),
        ],
        out_specs=pl.BlockSpec((1, cout, nt), lambda b_, j: (b_, 0, j)),
        compiler_params=pltpu.CompilerParams(
            dimension_semantics=("parallel", "parallel"),
            vmem_limit_bytes=64 * 1024 * 1024,
        ),
    )(x, w, b.reshape(cout, 1))


# ----------------------------------------------------------------------------
# Kernel 2: fused deformable sampling + sigmoid-attention combine
#   per (batch, head, query-tile) program:
#     for each level i:
#       comb = sum_p  sigmoid(aw[i,p]) * bilinear_one_hot(vhw_i, Qt)
#       acc += value_i (Cv, vhw_i) @ comb                (single MXU matmul)
#     o = acc                                            (lane-dense store)
# ----------------------------------------------------------------------------
def _sample_combine_kernel(qp_ref, ref_ref, *rest, L, P, Cv, Qt, vshapes):
    val_refs = rest[:L]
    o_ref = rest[L]

    qp = qp_ref[0, 0]            # (L*P*3, Qt): [off_l0(P*2) ... off_l{L-1}, attn(L*P)]
    rx = ref_ref[0, 0:1, :]      # (1, Qt)
    ry = ref_ref[0, 1:2, :]
    aw = qp[L * P * 2:, :]       # (L*P, Qt), (level, point) order
    sig = 1.0 / (1.0 + jnp.exp(-aw))   # Sigmoid ("softmax" in the module)

    acc = jnp.zeros((Cv, Qt), jnp.float32)
    for i in range(L):
        vh, vw = vshapes[i]
        vhw = vh * vw
        row_iota = lax.broadcasted_iota(jnp.int32, (vhw, Qt), 0)
        comb = jnp.zeros((vhw, Qt), jnp.float32)
        for p in range(P):
            base = i * P * 2 + 2 * p
            ox = qp[base:base + 1, :] * (1.0 / vw)
            oy = qp[base + 1:base + 2, :] * (1.0 / vh)
            # sampling grid in [-1, 1], then unnormalize (align_corners=False)
            gx = 2.0 * (rx + ox) - 1.0
            gy = 2.0 * (ry + oy) - 1.0
            ix = (gx + 1.0) * (vw * 0.5) - 0.5
            iy = (gy + 1.0) * (vh * 0.5) - 0.5
            x0 = jnp.floor(ix)
            y0 = jnp.floor(iy)
            x1 = x0 + 1.0
            y1 = y0 + 1.0
            wx1 = ix - x0
            wx0 = 1.0 - wx1
            wy1 = iy - y0
            wy0 = 1.0 - wy1
            wp = sig[i * P + p:i * P + p + 1, :]    # (1, Qt) attention weight

            def corner(xc, yc, wgt):
                valid = ((xc >= 0.0) & (xc <= float(vw - 1))
                         & (yc >= 0.0) & (yc <= float(vh - 1)))
                idx = (yc * float(vw) + xc).astype(jnp.int32)     # (1, Qt)
                wv = wgt * wp * valid.astype(jnp.float32)         # (1, Qt)
                return jnp.where(row_iota == idx, wv, 0.0)        # (vhw, Qt)

            comb = comb + (corner(x0, y0, wx0 * wy0) + corner(x1, y0, wx1 * wy0)
                           + corner(x0, y1, wx0 * wy1) + corner(x1, y1, wx1 * wy1))

        val = val_refs[i][0, 0]                                   # (Cv, vhw)
        acc = acc + jnp.dot(val, comb,
                            preferred_element_type=jnp.float32,
                            precision=_HIGHEST)
    o_ref[0, 0] = acc


def sample_combine(qproj, ref_pts, v_projs, *, bs, H, L, P, Cv, HWq, vshapes):
    Qt = _pick_tile(HWq)
    kernel = functools.partial(_sample_combine_kernel, L=L, P=P, Cv=Cv, Qt=Qt,
                               vshapes=tuple(vshapes))
    in_specs = [
        pl.BlockSpec((1, 1, L * P * 3, Qt), lambda b, h, q: (b, h, 0, q)),
        pl.BlockSpec((1, 2, Qt), lambda b, h, q: (b, 0, q)),
    ]
    for (vh, vw) in vshapes:
        in_specs.append(
            pl.BlockSpec((1, 1, Cv, vh * vw), lambda b, h, q: (b, h, 0, 0)))
    return pl.pallas_call(
        kernel,
        out_shape=jax.ShapeDtypeStruct((bs, H, Cv, HWq), jnp.float32),
        grid=(bs, H, HWq // Qt),
        in_specs=in_specs,
        out_specs=pl.BlockSpec((1, 1, Cv, Qt), lambda b, h, q: (b, h, 0, q)),
        compiler_params=pltpu.CompilerParams(
            dimension_semantics=("parallel", "parallel", "arbitrary"),
            vmem_limit_bytes=64 * 1024 * 1024,
        ),
    )(qproj, ref_pts, *v_projs)


# ----------------------------------------------------------------------------
# Fused query-side weights: per-head channel layout
#   [off_level0 (P*2), ..., off_level{L-1} (P*2), attn (L*P)]
# so the sampler can take one contiguous (L*P*3, HWq) block per head.
# ----------------------------------------------------------------------------
def _fuse_query_weights(params, *, H, L, P):
    d_model = params["attn_w"].shape[1]
    off_w = [params["off_w"][i].reshape(H, P * 2, d_model) for i in range(L)]
    att_w = params["attn_w"].reshape(H, L * P, d_model)
    w = jnp.concatenate(off_w + [att_w], axis=1).reshape(H * L * P * 3, d_model)
    off_b = [params["off_b"][i].reshape(H, P * 2) for i in range(L)]
    att_b = params["attn_b"].reshape(H, L * P)
    b = jnp.concatenate(off_b + [att_b], axis=1).reshape(H * L * P * 3)
    return w, b


# ----------------------------------------------------------------------------
# Parameters (replicating _reset_parameters deterministically)
# ----------------------------------------------------------------------------
def init_params(key, d_model, n_levels, n_heads, n_points):
    H, L, P = n_heads, n_levels, n_points
    thetas = jnp.arange(H, dtype=jnp.float32) * (2.0 * math.pi / H)
    grid_init = jnp.stack([jnp.cos(thetas), jnp.sin(thetas)], -1)          # (H, 2)
    grid_init = grid_init / jnp.max(jnp.abs(grid_init), axis=-1, keepdims=True)
    grid_init = jnp.tile(grid_init.reshape(H, 1, 1, 2), (1, L, P, 1))      # (H, L, P, 2)
    scale = jnp.arange(1, P + 1, dtype=jnp.float32).reshape(1, 1, P, 1)
    grid_init = grid_init * scale

    def xavier(k, cout, cin):
        a = math.sqrt(6.0 / (cin + cout))
        return jax.random.uniform(k, (cout, cin), jnp.float32, -a, a)

    keys = jax.random.split(key, L + 1)
    params = {
        "off_w": [jnp.zeros((H * P * 2, d_model), jnp.float32) for _ in range(L)],
        "off_b": [grid_init[:, j, :, :].reshape(-1) for j in range(L)],
        "val_w": [xavier(keys[j], d_model, d_model) for j in range(L)],
        "val_b": [jnp.zeros((d_model,), jnp.float32) for _ in range(L)],
        "attn_w": jnp.zeros((H * L * P, d_model), jnp.float32),
        "attn_b": jnp.zeros((H * L * P,), jnp.float32),
        "out_w": xavier(keys[L], d_model, d_model),
        "out_b": jnp.zeros((d_model,), jnp.float32),
    }
    return params


# ----------------------------------------------------------------------------
# Forward pass (Pallas kernels + reshape-only glue: no wrapper transposes)
# ----------------------------------------------------------------------------
def msda4dim_forward(params, query, reference_points, values,
                     *, d_model, n_levels, n_heads, n_points):
    bs, C, len_h, len_w = query.shape
    H, L, P = n_heads, n_levels, n_points
    Cv = d_model // H
    HWq = len_h * len_w

    q = query.reshape(bs, C, HWq)
    ref = reference_points.reshape(bs, 2, HWq)

    # Fused query-side 1x1 conv: all L sampling_offsets convs + attention conv.
    wq, bq = _fuse_query_weights(params, H=H, L=L, P=P)
    qproj = conv1x1(q, wq, bq)                               # (bs, H*L*P*3, HWq)
    qproj = qproj.reshape(bs, H, L * P * 3, HWq)             # free (head-major)

    # Per-level value projections (1x1 conv), per-head layout via free reshape.
    v_projs, vshapes = [], []
    for i in range(L):
        vh, vw = values[i].shape[-2:]
        vshapes.append((vh, vw))
        v = values[i].reshape(bs, C, vh * vw)
        vp = conv1x1(v, params["val_w"][i], params["val_b"][i])   # (bs, d_model, vhw)
        v_projs.append(vp.reshape(bs, H, Cv, vh * vw))

    # Fused deformable sampling + sigmoid-attention combine.
    res = sample_combine(qproj, ref, v_projs, bs=bs, H=H, L=L, P=P,
                         Cv=Cv, HWq=HWq, vshapes=vshapes)     # (bs, H, Cv, HWq)
    res = res.reshape(bs, d_model, HWq)

    out = conv1x1(res, params["out_w"], params["out_b"])      # (bs, d_model, HWq)
    return out.reshape(bs, d_model, len_h, len_w)


# ----------------------------------------------------------------------------
# Pure-JAX reference (for numerical verification)
# ----------------------------------------------------------------------------
def _grid_sample_ref(img, grid):
    # img: (N, C, Hin, Win), grid: (N, Hout, Wout, 2) xy in [-1, 1]
    N, C, Hin, Win = img.shape
    Hout, Wout = grid.shape[1:3]
    gx, gy = grid[..., 0], grid[..., 1]
    ix = (gx + 1.0) * Win / 2.0 - 0.5
    iy = (gy + 1.0) * Hin / 2.0 - 0.5
    x0, y0 = jnp.floor(ix), jnp.floor(iy)
    x1, y1 = x0 + 1.0, y0 + 1.0
    wx1, wy1 = ix - x0, iy - y0
    wx0, wy0 = 1.0 - wx1, 1.0 - wy1
    flat = img.reshape(N, C, Hin * Win)

    def gather(xc, yc):
        valid = (xc >= 0) & (xc <= Win - 1) & (yc >= 0) & (yc <= Hin - 1)
        xi = jnp.clip(xc, 0, Win - 1).astype(jnp.int32)
        yi = jnp.clip(yc, 0, Hin - 1).astype(jnp.int32)
        idx = (yi * Win + xi).reshape(N, 1, Hout * Wout)
        idx = jnp.broadcast_to(idx, (N, C, Hout * Wout))
        g = jnp.take_along_axis(flat, idx, axis=2).reshape(N, C, Hout, Wout)
        return g * valid[:, None].astype(img.dtype)

    return (gather(x0, y0) * (wx0 * wy0)[:, None]
            + gather(x1, y0) * (wx1 * wy0)[:, None]
            + gather(x0, y1) * (wx0 * wy1)[:, None]
            + gather(x1, y1) * (wx1 * wy1)[:, None])


def msda4dim_reference(params, query, reference_points, values,
                       *, d_model, n_levels, n_heads, n_points):
    bs, C, len_h, len_w = query.shape
    H, L, P = n_heads, n_levels, n_points
    Cv = d_model // H
    HWq = len_h * len_w

    def conv(x, w, b):
        return (jnp.einsum("oc,bchw->bohw", w, x, precision=_HIGHEST)
                + b[None, :, None, None])

    sv_list = []
    for i in range(L):
        vh, vw = values[i].shape[-2:]
        off = conv(query, params["off_w"][i], params["off_b"][i])
        off = off.reshape(bs * H * P, 2, len_h, len_w)
        div = jnp.array([1.0 / vw, 1.0 / vh], jnp.float32).reshape(1, 2, 1, 1)
        off = (off * div).reshape(bs, H, P, 2, len_h, len_w)
        ref = reference_points.reshape(bs, 1, 1, 2, len_h, len_w)
        grids = 2.0 * (ref + off) - 1.0
        grids = grids.reshape(bs * H, P, 2, HWq).transpose(0, 1, 3, 2)
        v = conv(values[i], params["val_w"][i], params["val_b"][i])
        v = v.reshape(bs * H, Cv, vh, vw)
        sv_list.append(_grid_sample_ref(v, grids))                  # (bs*H, Cv, P, HWq)
    sv_all = jnp.concatenate(sv_list, axis=2)
    aw = conv(query, params["attn_w"], params["attn_b"]).reshape(bs * H, 1, L * P, HWq)
    aw = 1.0 / (1.0 + jnp.exp(-aw))
    res = jnp.sum(sv_all * aw, axis=2).reshape(bs, d_model, len_h, len_w)
    return conv(res, params["out_w"], params["out_b"])


# ----------------------------------------------------------------------------
if __name__ == "__main__":
    d_model, n_levels, n_heads, n_points = 32, 2, 4, 2
    bs, len_h, len_w = 2, 8, 8
    value_shapes = [(8, 8), (4, 4)]

    key = jax.random.PRNGKey(0)
    kq, kr, kv0, kv1, kp, kw1, kw2 = jax.random.split(key, 7)
    query = jax.random.normal(kq, (bs, d_model, len_h, len_w), jnp.float32)
    reference_points = jax.random.uniform(kr, (bs, 2, len_h, len_w), jnp.float32)
    values = [
        jax.random.normal(kv0, (bs, d_model, *value_shapes[0]), jnp.float32),
        jax.random.normal(kv1, (bs, d_model, *value_shapes[1]), jnp.float32),
    ]
    params = init_params(kp, d_model, n_levels, n_heads, n_points)
    # Perturb the zero-initialized offset/attention conv weights so the
    # query-dependent sampling and attention paths are actually exercised.
    off_keys = jax.random.split(kw1, n_levels)
    params["off_w"] = [
        0.05 * jax.random.normal(off_keys[i],
                                 (n_heads * n_points * 2, d_model), jnp.float32)
        for i in range(n_levels)
    ]
    params["attn_w"] = 0.1 * jax.random.normal(
        kw2, (n_heads * n_levels * n_points, d_model), jnp.float32)

    out = msda4dim_forward(params, query, reference_points, values,
                           d_model=d_model, n_levels=n_levels,
                           n_heads=n_heads, n_points=n_points)
    out = jax.block_until_ready(out)

    ref = msda4dim_reference(params, query, reference_points, values,
                             d_model=d_model, n_levels=n_levels,
                             n_heads=n_heads, n_points=n_points)
    ref = jax.block_until_ready(ref)

    assert out.shape == (bs, d_model, len_h, len_w)
    assert jnp.all(jnp.isfinite(out))
    max_err = float(jnp.max(jnp.abs(out - ref)))
    assert jnp.allclose(out, ref, atol=2e-3, rtol=2e-3), max_err
    print("KERNEL_OK")
</pallas_src>

<mosaic_0001>
module attributes {stable_mosaic.version = 11 : i64} {
  func.func @_conv1x1_kernel(%arg0: i32, %arg1: i32, %arg2: memref<1x32x64xf32, #tpu.memory_space<vmem>>, %arg3: memref<48x32xf32, #tpu.memory_space<vmem>>, %arg4: memref<48x1xf32, #tpu.memory_space<vmem>>, %arg5: memref<1x48x64xf32, #tpu.memory_space<vmem>>) attributes {dimension_semantics = [#tpu.dimension_semantics<parallel>, #tpu.dimension_semantics<parallel>], iteration_bounds = array<i64: 2, 1>, scalar_prefetch = 0 : i64, scratch_operands = 0 : i64, tpu.core_type = #tpu.core_type<tc>, window_params = [{transform_indices = @transform_0, window_bounds = array<i64: 1, 32, 64>}, {pipeline_mode = #tpu.pipeline_mode<synchronous>, transform_indices = @transform_1, window_bounds = array<i64: 48, 32>}, {pipeline_mode = #tpu.pipeline_mode<synchronous>, transform_indices = @transform_2, window_bounds = array<i64: 48, 1>}, {transform_indices = @transform_3, window_bounds = array<i64: 1, 48, 64>}]} {
    %c0 = arith.constant 0 : index
    %c0_0 = arith.constant 0 : index
    %0 = vector.load %arg3[%c0, %c0_0] : memref<48x32xf32, #tpu.memory_space<vmem>>, vector<48x32xf32>
    %c0_1 = arith.constant 0 : index
    %c0_2 = arith.constant 0 : index
    %c0_3 = arith.constant 0 : index
    %1 = vector.load %arg2[%c0_1, %c0_2, %c0_3] : memref<1x32x64xf32, #tpu.memory_space<vmem>>, vector<1x32x64xf32>
    %2 = vector.shape_cast %1 : vector<1x32x64xf32> to vector<32x64xf32>
    %cst = arith.constant dense<0.000000e+00> : vector<48x64xf32>
    %3 = tpu.matmul %0, %2, %cst {dimension_numbers = #tpu.dot_dimension_numbers<[1], [0], [0], [1], [0, 0, 1, 1], [], []>, precision = #tpu.contract_precision<fp32>} : vector<48x32xf32>, vector<32x64xf32>, vector<48x64xf32> -> vector<48x64xf32>
    %c0_4 = arith.constant 0 : index
    %c0_5 = arith.constant 0 : index
    %4 = vector.load %arg4[%c0_4, %c0_5] : memref<48x1xf32, #tpu.memory_space<vmem>>, vector<48x1xf32>
    %5 = vector.broadcast %4 : vector<48x1xf32> to vector<48x64xf32>
    %6 = arith.addf %3, %5 : vector<48x64xf32>
    %c0_6 = arith.constant 0 : index
    %c0_7 = arith.constant 0 : index
    %c0_8 = arith.constant 0 : index
    %7 = vector.load %arg5[%c0_6, %c0_7, %c0_8] : memref<1x48x64xf32, #tpu.memory_space<vmem>>, vector<1x48x64xf32>
    %8 = vector.shape_cast %7 : vector<1x48x64xf32> to vector<48x64xf32>
    %9 = vector.shape_cast %6 : vector<48x64xf32> to vector<1x48x64xf32>
    tpu.vector_store %arg5[%c0_6, %c0_7, %c0_8], %9 {strides = array<i32>} : memref<1x48x64xf32, #tpu.memory_space<vmem>>, vector<1x48x64xf32>,
    return
  }
  func.func @transform_0(%arg0: i32, %arg1: i32) -> (i32, i32, i32) {
    %c0_i32 = arith.constant 0 : i32
    %c0_i32_0 = arith.constant 0 : i32
    return %arg0, %c0_i32, %arg1 : i32, i32, i32
  }
  func.func @transform_1(%arg0: i32, %arg1: i32) -> (i32, i32) {
    %c0_i32 = arith.constant 0 : i32
    %c0_i32_0 = arith.constant 0 : i32
    %c0_i32_1 = arith.constant 0 : i32
    return %c0_i32, %c0_i32_0 : i32, i32
  }
  func.func @transform_2(%arg0: i32, %arg1: i32) -> (i32, i32) {
    %c0_i32 = arith.constant 0 : i32
    %c0_i32_0 = arith.constant 0 : i32
    %c0_i32_1 = arith.constant 0 : i32
    return %c0_i32, %c0_i32_0 : i32, i32
  }
  func.func @transform_3(%arg0: i32, %arg1: i32) -> (i32, i32, i32) {
    %c0_i32 = arith.constant 0 : i32
    %c0_i32_0 = arith.constant 0 : i32
    return %arg0, %c0_i32, %arg1 : i32, i32, i32
  }
}

</mosaic_0001>

<llo_original>
// kernel: tpu_custom_call.1
$region0: #{tpu_custom_call.1}
  #allocation0 [shape = 'u32[]', space=smem, size = 0x4, offset = 0x4, fixed_abs, tag = 'smem constant byte address 0x4 - core index']
  #allocation1 [shape = 'u32[144,128]{1,0:T(1,128)}', space=vmem, size = 0x12000, scoped, tag = 'internal scratch']
  %s0 = inlined_call_operand.hbm [shape: f32[2,32,64], index: 0, kind: input, shape index: {}]
  %s1 = inlined_call_operand.hbm [shape: f32[48,32], index: 1, kind: input, shape index: {}]
  %s2 = inlined_call_operand.hbm [shape: f32[48,1], index: 2, kind: input, shape index: {}]
  %s3 = inlined_call_operand.hbm [shape: f32[2,48,64], index: 3, kind: output, shape index: {}]
  %s4 = sld [smem:[#allocation0]]
  $region57: #{tpu_custom_call.1} parent=0
    _
  %s6 = ssub.s32 1, %s4
  %s7 = scalar_select 0, %s6, %s4
  $region1: #{tpu_custom_call.1} parent=0
    #allocation2 [shape = 'u8[32768]{0}', space=vmem, size = 0x8000, scoped, tag = 'input window, operand 0']
    #allocation3 [shape = 's32[2]{0}', space=sflag, size = 0x8, scoped, tag = 'scoped memory for tpu_custom_call.1']
    #allocation4 [shape = 's32[2]{0}', space=sflag, size = 0x8, scoped, tag = 'scoped memory for tpu_custom_call.1']
    #allocation5 [shape = 'u8[24576]{0}', space=vmem, size = 0x6000, scoped, tag = 'input window, operand 1, single buffered']
    #allocation6 [shape = 's32[1]{0}', space=sflag, size = 0x4, scoped, tag = 'scoped memory for tpu_custom_call.1']
    #allocation7 [shape = 'u8[24576]{0}', space=vmem, size = 0x6000, scoped, tag = 'input window, operand 2, single buffered']
    #allocation8 [shape = 'u8[49152]{0}', space=vmem, size = 0xc000, scoped, tag = 'output window, operand 0']
    %8 = vsyncpa [#allocation3], 0
    %s9 = scalar_lea.sflag [#allocation3], 1
    %10 = vsyncpa %s9, 0
    %11 = vsyncpa [#allocation6], 0
    %12 = vsyncpa [#allocation4], 0
    %s13 = scalar_lea.sflag [#allocation4], 1
    %14 = vsyncpa %s13, 0
    loop: start=0, step=1, limit=4
    $region2: #{tpu_custom_call.1} parent=1 // loop_pre_header
      _
    $region3: #{tpu_custom_call.1} parent=1 // loop_header
      %s16 = sphi 0, %s20
      %p17 = scmp.ge.s32.totalorder %s16, 4
      %s23 = sphi 0, %s35
      %s24 = sphi 0, %s31
      %s25 = sphi 0, %s23
      %s26 = sphi 0, %s24
      %s27 = sphi 0, %s25
      %s28 = sphi 0, %s26
      %s40 = sphi 0, %s42
      %s43 = sphi 0, %s40
      %s44 = sphi 0, %s43
      %s60 = sphi 0, %s44
      %s64 = sphi 0, %s64
      %s66 = sphi 0, %s64
      %s67 = sphi 0, %s66
      %s81 = sphi 0, %s67
      %s85 = sphi 0, %s85
      %s87 = sphi 0, %s85
      %s88 = sphi 0, %s87
      %s102 = sphi 0, %s88
      %s110 = sphi 0, %s112
      %s113 = sphi 0, %s110
      %s114 = sphi 0, %s113
      %s130 = sphi 0, %s114
    $region4: #{tpu_custom_call.1} parent=1 // loop_header_branch
      %19 = sbr.rel (%p17) target = $region8
    $region5: #{tpu_custom_call.1} parent=1 // loop_body
      %s21 = ssub.s32 %s16, 1
      %s22 = ssub.s32 %s16, 2
      %s29 = sadd.s32 1, %s24
      %p30 = scmp.ge.s32.totalorder %s29, 1
      %s31 = scalar_select %p30, 0, %s29
      %s32 = sadd.s32 1, %s23
      %s33 = scalar_select %p30, %s32, %s23
      %p34 = scmp.ge.s32.totalorder %s33, 2
      %s35 = scalar_select %p34, 0, %s33
      %s36 = ssub.s32 %s23, %s35
      %s37 = ssub.s32 %s24, %s31
      %s38 = sor.u32 %s36, %s37
      %p39 = scmp.eq.s32.totalorder %s38, 0
      %s41 = sadd.s32 %s40, 1
      %s42 = scalar_select %p39, %s40, %s41
      %p45 = pneg %p39
      %p46 = scmp.eq.s32.totalorder %s16, 1
      %p47 = por %p45, %p46
      %p48 = scmp.ne.s32.totalorder %s40, %s43
      %p49 = scmp.eq.s32.totalorder %s16, 0
      %p50 = por %p48, %p49
      %p51 = scmp.ne.s32.totalorder %s40, %s43
      %p52 = scmp.eq.s32.totalorder %s21, 1
      %p53 = por %p51, %p52
      %p54 = scmp.ne.s32.totalorder %s43, %s44
      %p55 = scmp.eq.s32.totalorder %s21, 0
      %p56 = por %p54, %p55
      %p57 = scmp.ne.s32.totalorder %s43, %s44
      %p58 = scmp.eq.s32.totalorder %s22, 1
      %p59 = por %p57, %p58
      %p61 = scmp.ne.s32.totalorder %s44, %s60
      %p62 = scmp.eq.s32.totalorder %s22, 0
      %p63 = por %p61, %p62
      %s65 = sadd.s32 %s64, 1
      %p68 = scmp.eq.s32.totalorder %s16, 1
      %p69 = scmp.ne.s32.totalorder %s64, %s66
      %p70 = scmp.eq.s32.totalorder %s16, 0
      %p71 = por %p69, %p70
      %p72 = scmp.ne.s32.totalorder %s64, %s66
      %p73 = scmp.eq.s32.totalorder %s21, 1
      %p74 = por %p72, %p73
      %p75 = scmp.ne.s32.totalorder %s66, %s67
      %p76 = scmp.eq.s32.totalorder %s21, 0
      %p77 = por %p75, %p76
      %p78 = scmp.ne.s32.totalorder %s66, %s67
      %p79 = scmp.eq.s32.totalorder %s22, 1
      %p80 = por %p78, %p79
      %p82 = scmp.ne.s32.totalorder %s67, %s81
      %p83 = scmp.eq.s32.totalorder %s22, 0
      %p84 = por %p82, %p83
      %s86 = sadd.s32 %s85, 1
      %p89 = scmp.eq.s32.totalorder %s16, 1
      %p90 = scmp.ne.s32.totalorder %s85, %s87
      %p91 = scmp.eq.s32.totalorder %s16, 0
      %p92 = por %p90, %p91
      %p93 = scmp.ne.s32.totalorder %s85, %s87
      %p94 = scmp.eq.s32.totalorder %s21, 1
      %p95 = por %p93, %p94
      %p96 = scmp.ne.s32.totalorder %s87, %s88
      %p97 = scmp.eq.s32.totalorder %s21, 0
      %p98 = por %p96, %p97
      %p99 = scmp.ne.s32.totalorder %s87, %s88
      %p100 = scmp.eq.s32.totalorder %s22, 1
      %p101 = por %p99, %p100
      %p103 = scmp.ne.s32.totalorder %s88, %s102
      %p104 = scmp.eq.s32.totalorder %s22, 0
      %p105 = por %p103, %p104
      %s106 = ssub.s32 %s23, %s35
      %s107 = ssub.s32 %s24, %s31
      %s108 = sor.u32 %s106, %s107
      %p109 = scmp.eq.s32.totalorder %s108, 0
      %s111 = sadd.s32 %s110, 1
      %s112 = scalar_select %p109, %s110, %s111
      %p115 = pneg %p109
      %p116 = scmp.eq.s32.totalorder %s16, 1
      %p117 = por %p115, %p116
      %p118 = scmp.ne.s32.totalorder %s110, %s113
      %p119 = scmp.eq.s32.totalorder %s16, 0
      %p120 = por %p118, %p119
      %p121 = scmp.ne.s32.totalorder %s110, %s113
      %p122 = scmp.eq.s32.totalorder %s21, 1
      %p123 = por %p121, %p122
      %p124 = scmp.ne.s32.totalorder %s113, %s114
      %p125 = scmp.eq.s32.totalorder %s21, 0
      %p126 = por %p124, %p125
      %p127 = scmp.ne.s32.totalorder %s113, %s114
      %p128 = scmp.eq.s32.totalorder %s22, 1
      %p129 = por %p127, %p128
      %p131 = scmp.ne.s32.totalorder %s114, %s130
      %p132 = scmp.eq.s32.totalorder %s22, 0
      %p133 = por %p131, %p132
      %p134 = scmp.le.s32.totalorder 1, %s16
      %p135 = scmp.lt.s32.totalorder %s16, 3
      %p136 = pnand %p134, %p135
      %p137 = pneg %p136
      // Predicated region
      $region9: #{tpu_custom_call.1} parent=5 // pred_check
        _
      $region10: #{tpu_custom_call.1} parent=5 // pred_check_branch
        %139 = sbr.rel (%p136) target = $region12
      $region11: #{tpu_custom_call.1} parent=5 // pred_region
        %s140 = ssub.s32 %s16, 1
        // Predicated region
        $region13: #{tpu_custom_call.1} parent=11 // pred_check
          %p141 = pneg %p77
        $region14: #{tpu_custom_call.1} parent=11 // pred_check_branch
          %143 = sbr.rel (%p141) target = $region16
        $region15: #{tpu_custom_call.1} parent=11 // pred_region
          %s145 = ssub.s32 768, 768
          %146 = vsyncadd [#allocation6], %s145
          %s147 = sshll.u32 [#allocation5], 4
          %s148 = int_to_ptr.vmem [resolvable:$true] %s147
          %153 = dma.hbm_to_vmem [thread:$0]  %s1, 768, %s148, [#allocation6], 128, 128, 8
        $region16: #{tpu_custom_call.1} parent=11 // pred_fallthru
          _
        // Predicated region
        $region17: #{tpu_custom_call.1} parent=11 // pred_check
          %p154 = pneg %p98
        $region18: #{tpu_custom_call.1} parent=11 // pred_check_branch
          %156 = sbr.rel (%p154) target = $region20
        $region19: #{tpu_custom_call.1} parent=11 // pred_region
          %s158 = ssub.s32 768, 768
          %159 = vsyncadd [#allocation6], %s158
          %s160 = sshll.u32 [#allocation7], 4
          %s161 = int_to_ptr.vmem [resolvable:$true] %s160
          %166 = dma.hbm_to_vmem [thread:$0]  %s2, 768, %s161, [#allocation6], 128, 128, 8
        $region20: #{tpu_custom_call.1} parent=11 // pred_fallthru
          _
      $region12: #{tpu_custom_call.1} parent=5 // pred_fallthru
        _
      %p167 = scmp.lt.s32.totalorder %s16, 2
      // Predicated region
      $region21: #{tpu_custom_call.1} parent=5 // pred_check
        %p168 = pneg %p167
      $region22: #{tpu_custom_call.1} parent=5 // pred_check_branch
        %170 = sbr.rel (%p168) target = $region24
      $region23: #{tpu_custom_call.1} parent=5 // pred_region
        // Predicated region
        $region25: #{tpu_custom_call.1} parent=23 // pred_check
          %p171 = pneg %p50
        $region26: #{tpu_custom_call.1} parent=23 // pred_check_branch
          %173 = sbr.rel (%p171) target = $region28
        $region27: #{tpu_custom_call.1} parent=23 // pred_region
          %s174 = sand.u32 %s40, 1
          %s175 = scalar_lea.sflag [#allocation3], %s174
          %s176 = sand.u32 %s40, 1
          %s177 = smul.addr %s176, 32
          %s178 = scalar_lea.vmem [#allocation2], %s177
          %s180 = ssub.s32 512, 512
          %181 = vsyncadd %s175, %s180
          %s182 = smul.addr %s23, 4
          %s183 = sadd.s32 %s24, %s182
          %s184 = smul.addr %s183, 128
          %s185 = scalar_lea.hbm %s0, %s184
          %s186 = sshll.u32 %s178, 4
          %s187 = int_to_ptr.vmem [resolvable:$true] %s186
          %192 = dma.hbm_to_vmem [thread:$0]  %s185, 512, %s187, %s175, 128, 128, 8
        $region28: #{tpu_custom_call.1} parent=23 // pred_fallthru
          _
      $region24: #{tpu_custom_call.1} parent=5 // pred_fallthru
        _
      %p193 = scmp.le.s32.totalorder 1, %s16
      %p194 = scmp.lt.s32.totalorder %s16, 3
      %p195 = pnand %p193, %p194
      %p196 = pneg %p195
      // Predicated region
      $region29: #{tpu_custom_call.1} parent=5 // pred_check
        _
      $region30: #{tpu_custom_call.1} parent=5 // pred_check_branch
        %198 = sbr.rel (%p195) target = $region32
      $region31: #{tpu_custom_call.1} parent=5 // pred_region
        %s199 = ssub.s32 %s16, 1
        %s200 = sand.u32 %s43, 1
        %s201 = scalar_lea.sflag [#allocation3], %s200
        %s202 = sand.u32 %s43, 1
        %s203 = smul.addr %s202, 32
        %s204 = scalar_lea.vmem [#allocation2], %s203
        // Predicated region
        $region33: #{tpu_custom_call.1} parent=31 // pred_check
          %p205 = pneg %p56
        $region34: #{tpu_custom_call.1} parent=31 // pred_check_branch
          %207 = sbr.rel (%p205) target = $region36
        $region35: #{tpu_custom_call.1} parent=31 // pred_region
          %208 = dma.done %s201, 512
        $region36: #{tpu_custom_call.1} parent=31 // pred_fallthru
          _
        // Predicated region
        $region37: #{tpu_custom_call.1} parent=31 // pred_check
          %p209 = pneg %p77
        $region38: #{tpu_custom_call.1} parent=31 // pred_check_branch
          %211 = sbr.rel (%p209) target = $region40
        $region39: #{tpu_custom_call.1} parent=31 // pred_region
          %212 = dma.done [#allocation6], 768
        $region40: #{tpu_custom_call.1} parent=31 // pred_fallthru
          _
        // Predicated region
        $region41: #{tpu_custom_call.1} parent=31 // pred_check
          %p213 = pneg %p98
        $region42: #{tpu_custom_call.1} parent=31 // pred_check_branch
          %215 = sbr.rel (%p213) target = $region44
        $region43: #{tpu_custom_call.1} parent=31 // pred_region
          %216 = dma.done [#allocation6], 768
        $region44: #{tpu_custom_call.1} parent=31 // pred_fallthru
          _
        %s217 = sand.u32 %s43, 1
        %s218 = scalar_lea.sflag [#allocation3], %s217
        %s219 = sand.u32 %s43, 1
        %s220 = smul.addr %s219, 32
        %s221 = scalar_lea.vmem [#allocation2], %s220
        %p222 = pneg %p56
        %p223 = pneg %p53
        %p224 = pneg %p77
        %p225 = pneg %p74
        %p226 = pneg %p98
        %p227 = pneg %p95
        %p228 = pneg %p126
        %p229 = pneg %p123
        %s230 = sand.u32 %s113, 1
        %s231 = scalar_lea.sflag [#allocation4], %s230
        %s232 = sand.u32 %s113, 1
        %s233 = smul.addr %s232, 48
        %s234 = scalar_lea.vmem [#allocation8], %s233
        %v235 = vld [vmem:[#allocation5] sm:$0xff]
        %v236 = vld [vmem:[#allocation5 + $0x8] sm:$0xff]
        %v237 = vld [vmem:[#allocation5 + $0x10] sm:$0xff]
        %v238 = vld [vmem:[#allocation5 + $0x18] sm:$0xff]
        %v239 = vld [vmem:[#allocation5 + $0x20] sm:$0xff]
        %v240 = vld [vmem:[#allocation5 + $0x28] sm:$0xff]
        %v241 = vld [vmem:[%s204] sm:$0xff]
        %v242 = vld [vmem:[%s204 + $0x8] sm:$0xff]
        %v243 = vld [vmem:[%s204 + $0x10] sm:$0xff]
        %v244 = vld [vmem:[%s204 + $0x18] sm:$0xff]
        %v245 = vld [vmem:[#allocation7] sm:$0xff]
        %v246 = vld [vmem:[#allocation7 + $0x8] sm:$0xff]
        %v247 = vld [vmem:[#allocation7 + $0x10] sm:$0xff]
        %v248 = vld [vmem:[#allocation7 + $0x18] sm:$0xff]
        %v249 = vld [vmem:[#allocation7 + $0x20] sm:$0xff]
        %v250 = vld [vmem:[#allocation7 + $0x28] sm:$0xff]
        %252 = vset.pattern.permute.xlu0 0
        %253 = vperm.xlu0 %252, %v245
        %v254 = vpop.permute.xlu0 %253
        %257 = vset.pattern.permute.xlu0 0
        %258 = vperm.xlu0 %257, %v246
        %v259 = vpop.permute.xlu0 %258
        %262 = vset.pattern.permute.xlu0 0
        %263 = vperm.xlu0 %262, %v247
        %v264 = vpop.permute.xlu0 %263
        %267 = vset.pattern.permute.xlu0 0
        %268 = vperm.xlu0 %267, %v248
        %v269 = vpop.permute.xlu0 %268
        %272 = vset.pattern.permute.xlu0 0
        %273 = vperm.xlu0 %272, %v249
        %v274 = vpop.permute.xlu0 %273
        %277 = vset.pattern.permute.xlu0 0
        %278 = vperm.xlu0 %277, %v250
        %v279 = vpop.permute.xlu0 %278
        %vm281 = vcmask 261120
        %v283 = vsel %vm281, %v235, 0
        %v286 = vsel %vm281, %v236, 0
        %v289 = vsel %vm281, %v237, 0
        %v292 = vsel %vm281, %v238, 0
        %v295 = vsel %vm281, %v239, 0
        %v298 = vsel %vm281, %v240, 0
        %300 = vmatprep.subr.mxu0 0.0
        %v301 = vand.u32 %v241, 4294901760
        %302 = vmatpush1.msra.mxu0 %v301
        %303 = vmatprep.subr.mxu0 0.0
        %v304 = vand.u32 %v242, 4294901760
        %305 = vmatpush1.msra.mxu0 %v304
        %306 = vmatprep.subr.mxu0 0.0
        %v307 = vand.u32 %v243, 4294901760
        %308 = vmatpush1.msra.mxu0 %v307
        %309 = vmatprep.subr.mxu0 0.0
        %v310 = vand.u32 %v244, 4294901760
        %311 = vmatpush1.msra.mxu0 %v310
        %312 = vmatprep.subr.mxu0 0.0
        %313 = vmatpush1.msra.mxu0 0.0
        %314 = vmatprep.subr.mxu0 0.0
        %315 = vmatpush1.msra.mxu0 0.0
        %316 = vmatprep.subr.mxu0 0.0
        %317 = vmatpush1.msra.mxu0 0.0
        %318 = vmatprep.subr.mxu0 0.0
        %319 = vmatpush1.msra.mxu0 0.0
        %320 = vmatprep.subr.mxu0 0.0
        %321 = vmatpush1.msra.mxu0 0.0
        %322 = vmatprep.subr.mxu0 0.0
        %323 = vmatpush1.msra.mxu0 0.0
        %324 = vmatprep.subr.mxu0 0.0
        %325 = vmatpush1.msra.mxu0 0.0
        %326 = vmatprep.subr.mxu0 0.0
        %327 = vmatpush1.msra.mxu0 0.0
        %328 = vmatprep.subr.mxu0 0.0
        %329 = vmatpush1.msra.mxu0 0.0
        %330 = vmatprep.subr.mxu0 0.0
        %331 = vmatpush1.msra.mxu0 0.0
        %332 = vmatprep.subr.mxu0 0.0
        %333 = vmatpush1.msra.mxu0 0.0
        %334 = vmatprep.subr.mxu0 0.0
        %335 = vmatpush1.msra.mxu0 0.0
        %336 = vmatprep.subr.mxu0 0.0
        %337 = vmatpush1.msra.mxu0 0.0
        %338 = vmatprep.subr.mxu0 0.0
        %339 = vmatpush1.msra.mxu0 0.0
        %340 = vmatprep.subr.mxu0 0.0
        %341 = vmatpush1.msra.mxu0 0.0
        %342 = vmatprep.subr.mxu0 0.0
        %343 = vmatpush1.msra.mxu0 0.0
        %344 = vmatprep.subr.mxu0 0.0
        %345 = vmatpush1.msra.mxu0 0.0
        %346 = vmatprep.subr.mxu0 0.0
        %347 = vmatpush1.msra.mxu0 0.0
        %348 = vmatprep.subr.mxu0 0.0
        %349 = vmatpush1.msra.mxu0 0.0
        %350 = vmatprep.subr.mxu0 0.0
        %351 = vmatpush1.msra.mxu0 0.0
        %352 = vmatprep.subr.mxu0 0.0
        %353 = vmatpush1.msra.mxu0 0.0
        %354 = vmatprep.subr.mxu0 0.0
        %355 = vmatpush1.msra.mxu0 0.0
        %356 = vmatprep.subr.mxu0 0.0
        %357 = vmatpush1.msra.mxu0 0.0
        %358 = vmatprep.subr.mxu0 0.0
        %359 = vmatpush1.msra.mxu0 0.0
        %360 = vmatprep.subr.mxu0 0.0
        %361 = vmatpush1.msra.mxu0 0.0
        %362 = vmatprep.subr.mxu0 0.0
        %363 = vmatpush1.msra.mxu0 0.0
        %364 = vmatprep.subr.mxu0 0.0
        %365 = vmatpush1.msra.mxu0 0.0
        %366 = vmatprep.subr.mxu0 0.0
        %367 = vmatpush1.msra.mxu0 0.0
        %368 = vmatprep.mubr.f32.mxu0 0.0
        %v369 = vand.u32 %v283, 4294901760
        %v370 = vsub.f32 %v283, %v369
        %v371 = vand.u32 %v370, 4294901760
        %v372 = vsub.f32 %v370, %v371
        %v373 = vand.u32 %v372, 4294901760
        %374 = vmatmul.mubr.f32.gmra.mrb[0].mxu0 %v373
        %v375 = vpop.f32.mrb[0].mxu0
        %v376 = vadd.f32 %v254, %v375
        %v377 = vpop.f32.mrb[0].mxu0
        %378 = vmatprep.mubr.f32.mxu0 0.0
        %v379 = vand.u32 %v286, 4294901760
        %v380 = vsub.f32 %v286, %v379
        %v381 = vand.u32 %v380, 4294901760
        %v382 = vsub.f32 %v380, %v381
        %v383 = vand.u32 %v382, 4294901760
        %384 = vmatmul.mubr.f32.gmra.mrb[0].mxu0 %v383
        %v385 = vpop.f32.mrb[0].mxu0
        %v386 = vadd.f32 %v259, %v385
        %v387 = vpop.f32.mrb[0].mxu0
        %388 = vmatprep.mubr.f32.mxu0 0.0
        %v389 = vand.u32 %v289, 4294901760
        %v390 = vsub.f32 %v289, %v389
        %v391 = vand.u32 %v390, 4294901760
        %v392 = vsub.f32 %v390, %v391
        %v393 = vand.u32 %v392, 4294901760
        %394 = vmatmul.mubr.f32.gmra.mrb[0].mxu0 %v393
        %v395 = vpop.f32.mrb[0].mxu0
        %v396 = vadd.f32 %v264, %v395
        %v397 = vpop.f32.mrb[0].mxu0
        %398 = vmatprep.mubr.f32.mxu0 0.0
        %v399 = vand.u32 %v292, 4294901760
        %v400 = vsub.f32 %v292, %v399
        %v401 = vand.u32 %v400, 4294901760
        %v402 = vsub.f32 %v400, %v401
        %v403 = vand.u32 %v402, 4294901760
        %404 = vmatmul.mubr.f32.gmra.mrb[0].mxu0 %v403
        %v405 = vpop.f32.mrb[0].mxu0
        %v406 = vadd.f32 %v269, %v405
        %v407 = vpop.f32.mrb[0].mxu0
        %408 = vmatprep.mubr.f32.mxu0 0.0
        %v409 = vand.u32 %v295, 4294901760
        %v410 = vsub.f32 %v295, %v409
        %v411 = vand.u32 %v410, 4294901760
        %v412 = vsub.f32 %v410, %v411
        %v413 = vand.u32 %v412, 4294901760
        %414 = vmatmul.mubr.f32.gmra.mrb[0].mxu0 %v413
        %v415 = vpop.f32.mrb[0].mxu0
        %v416 = vadd.f32 %v274, %v415
        %v417 = vpop.f32.mrb[0].mxu0
        %418 = vmatprep.mubr.f32.mxu0 0.0
        %v419 = vand.u32 %v298, 4294901760
        %v420 = vsub.f32 %v298, %v419
        %v421 = vand.u32 %v420, 4294901760
        %v422 = vsub.f32 %v420, %v421
        %v423 = vand.u32 %v422, 4294901760
        %424 = vmatmul.mubr.f32.gmra.mrb[0].mxu0 %v423
        %v425 = vpop.f32.mrb[0].mxu0
        %v426 = vadd.f32 %v279, %v425
        %v427 = vpop.f32.mrb[0].mxu0
        %428 = vdwg.mxu0
        %429 = vmatprep.subr.mxu0 0.0
        %v430 = vand.u32 %v241, 4294901760
        %v431 = vsub.f32 %v241, %v430
        %v432 = vand.u32 %v431, 4294901760
        %v433 = vsub.f32 %v431, %v432
        %v434 = vand.u32 %v433, 4294901760
        %435 = vmatpush1.msra.mxu0 %v434
        %436 = vmatprep.subr.mxu0 0.0
        %v437 = vand.u32 %v242, 4294901760
        %v438 = vsub.f32 %v242, %v437
        %v439 = vand.u32 %v438, 4294901760
        %v440 = vsub.f32 %v438, %v439
        %v441 = vand.u32 %v440, 4294901760
        %442 = vmatpush1.msra.mxu0 %v441
        %443 = vmatprep.subr.mxu0 0.0
        %v444 = vand.u32 %v243, 4294901760
        %v445 = vsub.f32 %v243, %v444
        %v446 = vand.u32 %v445, 4294901760
        %v447 = vsub.f32 %v445, %v446
        %v448 = vand.u32 %v447, 4294901760
        %449 = vmatpush1.msra.mxu0 %v448
        %450 = vmatprep.subr.mxu0 0.0
        %v451 = vand.u32 %v244, 4294901760
        %v452 = vsub.f32 %v244, %v451
        %v453 = vand.u32 %v452, 4294901760
        %v454 = vsub.f32 %v452, %v453
        %v455 = vand.u32 %v454, 4294901760
        %456 = vmatpush1.msra.mxu0 %v455
        %457 = vmatprep.subr.mxu0 0.0
        %458 = vmatpush1.msra.mxu0 0.0
        %459 = vmatprep.subr.mxu0 0.0
        %460 = vmatpush1.msra.mxu0 0.0
        %461 = vmatprep.subr.mxu0 0.0
        %462 = vmatpush1.msra.mxu0 0.0
        %463 = vmatprep.subr.mxu0 0.0
        %464 = vmatpush1.msra.mxu0 0.0
        %465 = vmatprep.subr.mxu0 0.0
        %466 = vmatpush1.msra.mxu0 0.0
        %467 = vmatprep.subr.mxu0 0.0
        %468 = vmatpush1.msra.mxu0 0.0
        %469 = vmatprep.subr.mxu0 0.0
        %470 = vmatpush1.msra.mxu0 0.0
        %471 = vmatprep.subr.mxu0 0.0
        %472 = vmatpush1.msra.mxu0 0.0
        %473 = vmatprep.subr.mxu0 0.0
        %474 = vmatpush1.msra.mxu0 0.0
        %475 = vmatprep.subr.mxu0 0.0
        %476 = vmatpush1.msra.mxu0 0.0
        %477 = vmatprep.subr.mxu0 0.0
        %478 = vmatpush1.msra.mxu0 0.0
        %479 = vmatprep.subr.mxu0 0.0
        %480 = vmatpush1.msra.mxu0 0.0
        %481 = vmatprep.subr.mxu0 0.0
        %482 = vmatpush1.msra.mxu0 0.0
        %483 = vmatprep.subr.mxu0 0.0
        %484 = vmatpush1.msra.mxu0 0.0
        %485 = vmatprep.subr.mxu0 0.0
        %486 = vmatpush1.msra.mxu0 0.0
        %487 = vmatprep.subr.mxu0 0.0
        %488 = vmatpush1.msra.mxu0 0.0
        %489 = vmatprep.subr.mxu0 0.0
        %490 = vmatpush1.msra.mxu0 0.0
        %491 = vmatprep.subr.mxu0 0.0
        %492 = vmatpush1.msra.mxu0 0.0
        %493 = vmatprep.subr.mxu0 0.0
        %494 = vmatpush1.msra.mxu0 0.0
        %495 = vmatprep.subr.mxu0 0.0
        %496 = vmatpush1.msra.mxu0 0.0
        %497 = vmatprep.subr.mxu0 0.0
        %498 = vmatpush1.msra.mxu0 0.0
        %499 = vmatprep.subr.mxu0 0.0
        %500 = vmatpush1.msra.mxu0 0.0
        %501 = vmatprep.subr.mxu0 0.0
        %502 = vmatpush1.msra.mxu0 0.0
        %503 = vmatprep.subr.mxu0 0.0
        %504 = vmatpush1.msra.mxu0 0.0
        %505 = vmatprep.subr.mxu0 0.0
        %506 = vmatpush1.msra.mxu0 0.0
        %507 = vmatprep.subr.mxu0 0.0
        %508 = vmatpush1.msra.mxu0 0.0
        %509 = vmatprep.subr.mxu0 0.0
        %510 = vmatpush1.msra.mxu0 0.0
        %511 = vmatprep.subr.mxu0 0.0
        %512 = vmatpush1.msra.mxu0 0.0
        %513 = vmatprep.mubr.f32.mxu0 0.0
        %v514 = vand.u32 %v283, 4294901760
        %515 = vmatmul.mubr.f32.gmra.mrb[0].mxu0 %v514
        %v516 = vpop.f32.mrb[0].mxu0
        %v517 = vadd.f32 %v376, %v516
        %v518 = vpop.f32.mrb[0].mxu0
        %519 = vmatprep.mubr.f32.mxu0 0.0
        %v520 = vand.u32 %v286, 4294901760
        %521 = vmatmul.mubr.f32.gmra.mrb[0].mxu0 %v520
        %v522 = vpop.f32.mrb[0].mxu0
        %v523 = vadd.f32 %v386, %v522
        %v524 = vpop.f32.mrb[0].mxu0
        %525 = vmatprep.mubr.f32.mxu0 0.0
        %v526 = vand.u32 %v289, 4294901760
        %527 = vmatmul.mubr.f32.gmra.mrb[0].mxu0 %v526
        %v528 = vpop.f32.mrb[0].mxu0
        %v529 = vadd.f32 %v396, %v528
        %v530 = vpop.f32.mrb[0].mxu0
        %531 = vmatprep.mubr.f32.mxu0 0.0
        %v532 = vand.u32 %v292, 4294901760
        %533 = vmatmul.mubr.f32.gmra.mrb[0].mxu0 %v532
        %v534 = vpop.f32.mrb[0].mxu0
        %v535 = vadd.f32 %v406, %v534
        %v536 = vpop.f32.mrb[0].mxu0
        %537 = vmatprep.mubr.f32.mxu0 0.0
        %v538 = vand.u32 %v295, 4294901760
        %539 = vmatmul.mubr.f32.gmra.mrb[0].mxu0 %v538
        %v540 = vpop.f32.mrb[0].mxu0
        %v541 = vadd.f32 %v416, %v540
        %v542 = vpop.f32.mrb[0].mxu0
        %543 = vmatprep.mubr.f32.mxu0 0.0
        %v544 = vand.u32 %v298, 4294901760
        %545 = vmatmul.mubr.f32.gmra.mrb[0].mxu0 %v544
        %v546 = vpop.f32.mrb[0].mxu0
        %v547 = vadd.f32 %v426, %v546
        %v548 = vpop.f32.mrb[0].mxu0
        %549 = vdwg.mxu0
        %550 = vmatprep.subr.mxu0 0.0
        %v551 = vand.u32 %v241, 4294901760
        %v552 = vsub.f32 %v241, %v551
        %553 = vmatpush1.msra.mxu0 %v552
        %554 = vmatprep.subr.mxu0 0.0
        %v555 = vand.u32 %v242, 4294901760
        %v556 = vsub.f32 %v242, %v555
        %557 = vmatpush1.msra.mxu0 %v556
        %558 = vmatprep.subr.mxu0 0.0
        %v559 = vand.u32 %v243, 4294901760
        %v560 = vsub.f32 %v243, %v559
        %561 = vmatpush1.msra.mxu0 %v560
        %562 = vmatprep.subr.mxu0 0.0
        %v563 = vand.u32 %v244, 4294901760
        %v564 = vsub.f32 %v244, %v563
        %565 = vmatpush1.msra.mxu0 %v564
        %566 = vmatprep.subr.mxu0 0.0
        %567 = vmatpush1.msra.mxu0 0.0
        %568 = vmatprep.subr.mxu0 0.0
        %569 = vmatpush1.msra.mxu0 0.0
        %570 = vmatprep.subr.mxu0 0.0
        %571 = vmatpush1.msra.mxu0 0.0
        %572 = vmatprep.subr.mxu0 0.0
        %573 = vmatpush1.msra.mxu0 0.0
        %574 = vmatprep.subr.mxu0 0.0
        %575 = vmatpush1.msra.mxu0 0.0
        %576 = vmatprep.subr.mxu0 0.0
        %577 = vmatpush1.msra.mxu0 0.0
        %578 = vmatprep.subr.mxu0 0.0
        %579 = vmatpush1.msra.mxu0 0.0
        %580 = vmatprep.subr.mxu0 0.0
        %581 = vmatpush1.msra.mxu0 0.0
        %582 = vmatprep.subr.mxu0 0.0
        %583 = vmatpush1.msra.mxu0 0.0
        %584 = vmatprep.subr.mxu0 0.0
        %585 = vmatpush1.msra.mxu0 0.0
        %586 = vmatprep.subr.mxu0 0.0
        %587 = vmatpush1.msra.mxu0 0.0
        %588 = vmatprep.subr.mxu0 0.0
        %589 = vmatpush1.msra.mxu0 0.0
        %590 = vmatprep.subr.mxu0 0.0
        %591 = vmatpush1.msra.mxu0 0.0
        %592 = vmatprep.subr.mxu0 0.0
        %593 = vmatpush1.msra.mxu0 0.0
        %594 = vmatprep.subr.mxu0 0.0
        %595 = vmatpush1.msra.mxu0 0.0
        %596 = vmatprep.subr.mxu0 0.0
        %597 = vmatpush1.msra.mxu0 0.0
        %598 = vmatprep.subr.mxu0 0.0
        %599 = vmatpush1.msra.mxu0 0.0
        %600 = vmatprep.subr.mxu0 0.0
        %601 = vmatpush1.msra.mxu0 0.0
        %602 = vmatprep.subr.mxu0 0.0
        %603 = vmatpush1.msra.mxu0 0.0
        %604 = vmatprep.subr.mxu0 0.0
        %605 = vmatpush1.msra.mxu0 0.0
        %606 = vmatprep.subr.mxu0 0.0
        %607 = vmatpush1.msra.mxu0 0.0
        %608 = vmatprep.subr.mxu0 0.0
        %609 = vmatpush1.msra.mxu0 0.0
        %610 = vmatprep.subr.mxu0 0.0
        %611 = vmatpush1.msra.mxu0 0.0
        %612 = vmatprep.subr.mxu0 0.0
        %613 = vmatpush1.msra.mxu0 0.0
        %614 = vmatprep.subr.mxu0 0.0
        %615 = vmatpush1.msra.mxu0 0.0
        %616 = vmatprep.subr.mxu0 0.0
        %617 = vmatpush1.msra.mxu0 0.0
        %618 = vmatprep.subr.mxu0 0.0
        %619 = vmatpush1.msra.mxu0 0.0
        %620 = vmatprep.subr.mxu0 0.0
        %621 = vmatpush1.msra.mxu0 0.0
        %622 = vmatprep.mubr.f32.mxu0 0.0
        %v623 = vand.u32 %v283, 4294901760
        %v624 = vsub.f32 %v283, %v623
        %625 = vmatmul.mubr.f32.gmra.mrb[0].mxu0 %v624
        %v626 = vpop.f32.mrb[0].mxu0
        %v627 = vadd.f32 %v517, %v626
        %v628 = vpop.f32.mrb[0].mxu0
        %629 = vmatprep.mubr.f32.mxu0 0.0
        %v630 = vand.u32 %v286, 4294901760
        %v631 = vsub.f32 %v286, %v630
        %632 = vmatmul.mubr.f32.gmra.mrb[0].mxu0 %v631
        %v633 = vpop.f32.mrb[0].mxu0
        %v634 = vadd.f32 %v523, %v633
        %v635 = vpop.f32.mrb[0].mxu0
        %636 = vmatprep.mubr.f32.mxu0 0.0
        %v637 = vand.u32 %v289, 4294901760
        %v638 = vsub.f32 %v289, %v637
        %639 = vmatmul.mubr.f32.gmra.mrb[0].mxu0 %v638
        %v640 = vpop.f32.mrb[0].mxu0
        %v641 = vadd.f32 %v529, %v640
        %v642 = vpop.f32.mrb[0].mxu0
        %643 = vmatprep.mubr.f32.mxu0 0.0
        %v644 = vand.u32 %v292, 4294901760
        %v645 = vsub.f32 %v292, %v644
        %646 = vmatmul.mubr.f32.gmra.mrb[0].mxu0 %v645
        %v647 = vpop.f32.mrb[0].mxu0
        %v648 = vadd.f32 %v535, %v647
        %v649 = vpop.f32.mrb[0].mxu0
        %650 = vmatprep.mubr.f32.mxu0 0.0
        %v651 = vand.u32 %v295, 4294901760
        %v652 = vsub.f32 %v295, %v651
        %653 = vmatmul.mubr.f32.gmra.mrb[0].mxu0 %v652
        %v654 = vpop.f32.mrb[0].mxu0
        %v655 = vadd.f32 %v541, %v654
        %v656 = vpop.f32.mrb[0].mxu0
        %657 = vmatprep.mubr.f32.mxu0 0.0
        %v658 = vand.u32 %v298, 4294901760
        %v659 = vsub.f32 %v298, %v658
        %660 = vmatmul.mubr.f32.gmra.mrb[0].mxu0 %v659
        %v661 = vpop.f32.mrb[0].mxu0
        %v662 = vadd.f32 %v547, %v661
        %v663 = vpop.f32.mrb[0].mxu0
        %664 = vdwg.mxu0
        %665 = vmatprep.subr.mxu0 0.0
        %v666 = vand.u32 %v241, 4294901760
        %667 = vmatpush1.msra.mxu0 %v666
        %668 = vmatprep.subr.mxu0 0.0
        %v669 = vand.u32 %v242, 4294901760
        %670 = vmatpush1.msra.mxu0 %v669
        %671 = vmatprep.subr.mxu0 0.0
        %v672 = vand.u32 %v243, 4294901760
        %673 = vmatpush1.msra.mxu0 %v672
        %674 = vmatprep.subr.mxu0 0.0
        %v675 = vand.u32 %v244, 4294901760
        %676 = vmatpush1.msra.mxu0 %v675
        %677 = vmatprep.subr.mxu0 0.0
        %678 = vmatpush1.msra.mxu0 0.0
        %679 = vmatprep.subr.mxu0 0.0
        %680 = vmatpush1.msra.mxu0 0.0
        %681 = vmatprep.subr.mxu0 0.0
        %682 = vmatpush1.msra.mxu0 0.0
        %683 = vmatprep.subr.mxu0 0.0
        %684 = vmatpush1.msra.mxu0 0.0
        %685 = vmatprep.subr.mxu0 0.0
        %686 = vmatpush1.msra.mxu0 0.0
        %687 = vmatprep.subr.mxu0 0.0
        %688 = vmatpush1.msra.mxu0 0.0
        %689 = vmatprep.subr.mxu0 0.0
        %690 = vmatpush1.msra.mxu0 0.0
        %691 = vmatprep.subr.mxu0 0.0
        %692 = vmatpush1.msra.mxu0 0.0
        %693 = vmatprep.subr.mxu0 0.0
        %694 = vmatpush1.msra.mxu0 0.0
        %695 = vmatprep.subr.mxu0 0.0
        %696 = vmatpush1.msra.mxu0 0.0
        %697 = vmatprep.subr.mxu0 0.0
        %698 = vmatpush1.msra.mxu0 0.0
        %699 = vmatprep.subr.mxu0 0.0
        %700 = vmatpush1.msra.mxu0 0.0
        %701 = vmatprep.subr.mxu0 0.0
        %702 = vmatpush1.msra.mxu0 0.0
        %703 = vmatprep.subr.mxu0 0.0
        %704 = vmatpush1.msra.mxu0 0.0
        %705 = vmatprep.subr.mxu0 0.0
        %706 = vmatpush1.msra.mxu0 0.0
        %707 = vmatprep.subr.mxu0 0.0
        %708 = vmatpush1.msra.mxu0 0.0
        %709 = vmatprep.subr.mxu0 0.0
        %710 = vmatpush1.msra.mxu0 0.0
        %711 = vmatprep.subr.mxu0 0.0
        %712 = vmatpush1.msra.mxu0 0.0
        %713 = vmatprep.subr.mxu0 0.0
        %714 = vmatpush1.msra.mxu0 0.0
        %715 = vmatprep.subr.mxu0 0.0
        %716 = vmatpush1.msra.mxu0 0.0
        %717 = vmatprep.subr.mxu0 0.0
        %718 = vmatpush1.msra.mxu0 0.0
        %719 = vmatprep.subr.mxu0 0.0
        %720 = vmatpush1.msra.mxu0 0.0
        %721 = vmatprep.subr.mxu0 0.0
        %722 = vmatpush1.msra.mxu0 0.0
        %723 = vmatprep.subr.mxu0 0.0
        %724 = vmatpush1.msra.mxu0 0.0
        %725 = vmatprep.subr.mxu0 0.0
        %726 = vmatpush1.msra.mxu0 0.0
        %727 = vmatprep.subr.mxu0 0.0
        %728 = vmatpush1.msra.mxu0 0.0
        %729 = vmatprep.subr.mxu0 0.0
        %730 = vmatpush1.msra.mxu0 0.0
        %731 = vmatprep.subr.mxu0 0.0
        %732 = vmatpush1.msra.mxu0 0.0
        %733 = vmatprep.mubr.f32.mxu0 0.0
        %v734 = vand.u32 %v283, 4294901760
        %v735 = vsub.f32 %v283, %v734
        %v736 = vand.u32 %v735, 4294901760
        %737 = vmatmul.mubr.f32.gmra.mrb[0].mxu0 %v736
        %v738 = vpop.f32.mrb[0].mxu0
        %v739 = vadd.f32 %v627, %v738
        %v740 = vpop.f32.mrb[0].mxu0
        %741 = vmatprep.mubr.f32.mxu0 0.0
        %v742 = vand.u32 %v286, 4294901760
        %v743 = vsub.f32 %v286, %v742
        %v744 = vand.u32 %v743, 4294901760
        %745 = vmatmul.mubr.f32.gmra.mrb[0].mxu0 %v744
        %v746 = vpop.f32.mrb[0].mxu0
        %v747 = vadd.f32 %v634, %v746
        %v748 = vpop.f32.mrb[0].mxu0
        %749 = vmatprep.mubr.f32.mxu0 0.0
        %v750 = vand.u32 %v289, 4294901760
        %v751 = vsub.f32 %v289, %v750
        %v752 = vand.u32 %v751, 4294901760
        %753 = vmatmul.mubr.f32.gmra.mrb[0].mxu0 %v752
        %v754 = vpop.f32.mrb[0].mxu0
        %v755 = vadd.f32 %v641, %v754
        %v756 = vpop.f32.mrb[0].mxu0
        %757 = vmatprep.mubr.f32.mxu0 0.0
        %v758 = vand.u32 %v292, 4294901760
        %v759 = vsub.f32 %v292, %v758
        %v760 = vand.u32 %v759, 4294901760
        %761 = vmatmul.mubr.f32.gmra.mrb[0].mxu0 %v760
        %v762 = vpop.f32.mrb[0].mxu0
        %v763 = vadd.f32 %v648, %v762
        %v764 = vpop.f32.mrb[0].mxu0
        %765 = vmatprep.mubr.f32.mxu0 0.0
        %v766 = vand.u32 %v295, 4294901760
        %v767 = vsub.f32 %v295, %v766
        %v768 = vand.u32 %v767, 4294901760
        %769 = vmatmul.mubr.f32.gmra.mrb[0].mxu0 %v768
        %v770 = vpop.f32.mrb[0].mxu0
        %v771 = vadd.f32 %v655, %v770
        %v772 = vpop.f32.mrb[0].mxu0
        %773 = vmatprep.mubr.f32.mxu0 0.0
        %v774 = vand.u32 %v298, 4294901760
        %v775 = vsub.f32 %v298, %v774
        %v776 = vand.u32 %v775, 4294901760
        %777 = vmatmul.mubr.f32.gmra.mrb[0].mxu0 %v776
        %v778 = vpop.f32.mrb[0].mxu0
        %v779 = vadd.f32 %v662, %v778
        %v780 = vpop.f32.mrb[0].mxu0
        %781 = vdwg.mxu0
        %782 = vmatprep.subr.mxu0 0.0
        %v783 = vand.u32 %v241, 4294901760
        %v784 = vsub.f32 %v241, %v783
        %v785 = vand.u32 %v784, 4294901760
        %786 = vmatpush1.msra.mxu0 %v785
        %787 = vmatprep.subr.mxu0 0.0
        %v788 = vand.u32 %v242, 4294901760
        %v789 = vsub.f32 %v242, %v788
        %v790 = vand.u32 %v789, 4294901760
        %791 = vmatpush1.msra.mxu0 %v790
        %792 = vmatprep.subr.mxu0 0.0
        %v793 = vand.u32 %v243, 4294901760
        %v794 = vsub.f32 %v243, %v793
        %v795 = vand.u32 %v794, 4294901760
        %796 = vmatpush1.msra.mxu0 %v795
        %797 = vmatprep.subr.mxu0 0.0
        %v798 = vand.u32 %v244, 4294901760
        %v799 = vsub.f32 %v244, %v798
        %v800 = vand.u32 %v799, 4294901760
        %801 = vmatpush1.msra.mxu0 %v800
        %802 = vmatprep.subr.mxu0 0.0
        %803 = vmatpush1.msra.mxu0 0.0
        %804 = vmatprep.subr.mxu0 0.0
        %805 = vmatpush1.msra.mxu0 0.0
        %806 = vmatprep.subr.mxu0 0.0
        %807 = vmatpush1.msra.mxu0 0.0
        %808 = vmatprep.subr.mxu0 0.0
        %809 = vmatpush1.msra.mxu0 0.0
        %810 = vmatprep.subr.mxu0 0.0
        %811 = vmatpush1.msra.mxu0 0.0
        %812 = vmatprep.subr.mxu0 0.0
        %813 = vmatpush1.msra.mxu0 0.0
        %814 = vmatprep.subr.mxu0 0.0
        %815 = vmatpush1.msra.mxu0 0.0
        %816 = vmatprep.subr.mxu0 0.0
        %817 = vmatpush1.msra.mxu0 0.0
        %818 = vmatprep.subr.mxu0 0.0
        %819 = vmatpush1.msra.mxu0 0.0
        %820 = vmatprep.subr.mxu0 0.0
        %821 = vmatpush1.msra.mxu0 0.0
        %822 = vmatprep.subr.mxu0 0.0
        %823 = vmatpush1.msra.mxu0 0.0
        %824 = vmatprep.subr.mxu0 0.0
        %825 = vmatpush1.msra.mxu0 0.0
        %826 = vmatprep.subr.mxu0 0.0
        %827 = vmatpush1.msra.mxu0 0.0
        %828 = vmatprep.subr.mxu0 0.0
        %829 = vmatpush1.msra.mxu0 0.0
        %830 = vmatprep.subr.mxu0 0.0
        %831 = vmatpush1.msra.mxu0 0.0
        %832 = vmatprep.subr.mxu0 0.0
        %833 = vmatpush1.msra.mxu0 0.0
        %834 = vmatprep.subr.mxu0 0.0
        %835 = vmatpush1.msra.mxu0 0.0
        %836 = vmatprep.subr.mxu0 0.0
        %837 = vmatpush1.msra.mxu0 0.0
        %838 = vmatprep.subr.mxu0 0.0
        %839 = vmatpush1.msra.mxu0 0.0
        %840 = vmatprep.subr.mxu0 0.0
        %841 = vmatpush1.msra.mxu0 0.0
        %842 = vmatprep.subr.mxu0 0.0
        %843 = vmatpush1.msra.mxu0 0.0
        %844 = vmatprep.subr.mxu0 0.0
        %845 = vmatpush1.msra.mxu0 0.0
        %846 = vmatprep.subr.mxu0 0.0
        %847 = vmatpush1.msra.mxu0 0.0
        %848 = vmatprep.subr.mxu0 0.0
        %849 = vmatpush1.msra.mxu0 0.0
        %850 = vmatprep.subr.mxu0 0.0
        %851 = vmatpush1.msra.mxu0 0.0
        %852 = vmatprep.subr.mxu0 0.0
        %853 = vmatpush1.msra.mxu0 0.0
        %854 = vmatprep.subr.mxu0 0.0
        %855 = vmatpush1.msra.mxu0 0.0
        %856 = vmatprep.subr.mxu0 0.0
        %857 = vmatpush1.msra.mxu0 0.0
        %858 = vmatprep.mubr.f32.mxu0 0.0
        %v859 = vand.u32 %v283, 4294901760
        %860 = vmatmul.mubr.f32.gmra.mrb[0].mxu0 %v859
        %v861 = vpop.f32.mrb[0].mxu0
        %v862 = vadd.f32 %v739, %v861
        %v863 = vpop.f32.mrb[0].mxu0
        %864 = vmatprep.mubr.f32.mxu0 0.0
        %v865 = vand.u32 %v286, 4294901760
        %866 = vmatmul.mubr.f32.gmra.mrb[0].mxu0 %v865
        %v867 = vpop.f32.mrb[0].mxu0
        %v868 = vadd.f32 %v747, %v867
        %v869 = vpop.f32.mrb[0].mxu0
        %870 = vmatprep.mubr.f32.mxu0 0.0
        %v871 = vand.u32 %v289, 4294901760
        %872 = vmatmul.mubr.f32.gmra.mrb[0].mxu0 %v871
        %v873 = vpop.f32.mrb[0].mxu0
        %v874 = vadd.f32 %v755, %v873
        %v875 = vpop.f32.mrb[0].mxu0
        %876 = vmatprep.mubr.f32.mxu0 0.0
        %v877 = vand.u32 %v292, 4294901760
        %878 = vmatmul.mubr.f32.gmra.mrb[0].mxu0 %v877
        %v879 = vpop.f32.mrb[0].mxu0
        %v880 = vadd.f32 %v763, %v879
        %v881 = vpop.f32.mrb[0].mxu0
        %882 = vmatprep.mubr.f32.mxu0 0.0
        %v883 = vand.u32 %v295, 4294901760
        %884 = vmatmul.mubr.f32.gmra.mrb[0].mxu0 %v883
        %v885 = vpop.f32.mrb[0].mxu0
        %v886 = vadd.f32 %v771, %v885
        %v887 = vpop.f32.mrb[0].mxu0
        %888 = vmatprep.mubr.f32.mxu0 0.0
        %v889 = vand.u32 %v298, 4294901760
        %890 = vmatmul.mubr.f32.gmra.mrb[0].mxu0 %v889
        %v891 = vpop.f32.mrb[0].mxu0
        %v892 = vadd.f32 %v779, %v891
        %v893 = vpop.f32.mrb[0].mxu0
        %894 = vdwg.mxu0
        %895 = vmatprep.subr.mxu0 0.0
        %v896 = vand.u32 %v241, 4294901760
        %897 = vmatpush1.msra.mxu0 %v896
        %898 = vmatprep.subr.mxu0 0.0
        %v899 = vand.u32 %v242, 4294901760
        %900 = vmatpush1.msra.mxu0 %v899
        %901 = vmatprep.subr.mxu0 0.0
        %v902 = vand.u32 %v243, 4294901760
        %903 = vmatpush1.msra.mxu0 %v902
        %904 = vmatprep.subr.mxu0 0.0
        %v905 = vand.u32 %v244, 4294901760
        %906 = vmatpush1.msra.mxu0 %v905
        %907 = vmatprep.subr.mxu0 0.0
        %908 = vmatpush1.msra.mxu0 0.0
        %909 = vmatprep.subr.mxu0 0.0
        %910 = vmatpush1.msra.mxu0 0.0
        %911 = vmatprep.subr.mxu0 0.0
        %912 = vmatpush1.msra.mxu0 0.0
        %913 = vmatprep.subr.mxu0 0.0
        %914 = vmatpush1.msra.mxu0 0.0
        %915 = vmatprep.subr.mxu0 0.0
        %916 = vmatpush1.msra.mxu0 0.0
        %917 = vmatprep.subr.mxu0 0.0
        %918 = vmatpush1.msra.mxu0 0.0
        %919 = vmatprep.subr.mxu0 0.0
        %920 = vmatpush1.msra.mxu0 0.0
        %921 = vmatprep.subr.mxu0 0.0
        %922 = vmatpush1.msra.mxu0 0.0
        %923 = vmatprep.subr.mxu0 0.0
        %924 = vmatpush1.msra.mxu0 0.0
        %925 = vmatprep.subr.mxu0 0.0
        %926 = vmatpush1.msra.mxu0 0.0
        %927 = vmatprep.subr.mxu0 0.0
        %928 = vmatpush1.msra.mxu0 0.0
        %929 = vmatprep.subr.mxu0 0.0
        %930 = vmatpush1.msra.mxu0 0.0
        %931 = vmatprep.subr.mxu0 0.0
        %932 = vmatpush1.msra.mxu0 0.0
        %933 = vmatprep.subr.mxu0 0.0
        %934 = vmatpush1.msra.mxu0 0.0
        %935 = vmatprep.subr.mxu0 0.0
        %936 = vmatpush1.msra.mxu0 0.0
        %937 = vmatprep.subr.mxu0 0.0
        %938 = vmatpush1.msra.mxu0 0.0
        %939 = vmatprep.subr.mxu0 0.0
        %940 = vmatpush1.msra.mxu0 0.0
        %941 = vmatprep.subr.mxu0 0.0
        %942 = vmatpush1.msra.mxu0 0.0
        %943 = vmatprep.subr.mxu0 0.0
        %944 = vmatpush1.msra.mxu0 0.0
        %945 = vmatprep.subr.mxu0 0.0
        %946 = vmatpush1.msra.mxu0 0.0
        %947 = vmatprep.subr.mxu0 0.0
        %948 = vmatpush1.msra.mxu0 0.0
        %949 = vmatprep.subr.mxu0 0.0
        %950 = vmatpush1.msra.mxu0 0.0
        %951 = vmatprep.subr.mxu0 0.0
        %952 = vmatpush1.msra.mxu0 0.0
        %953 = vmatprep.subr.mxu0 0.0
        %954 = vmatpush1.msra.mxu0 0.0
        %955 = vmatprep.subr.mxu0 0.0
        %956 = vmatpush1.msra.mxu0 0.0
        %957 = vmatprep.subr.mxu0 0.0
        %958 = vmatpush1.msra.mxu0 0.0
        %959 = vmatprep.subr.mxu0 0.0
        %960 = vmatpush1.msra.mxu0 0.0
        %961 = vmatprep.subr.mxu0 0.0
        %962 = vmatpush1.msra.mxu0 0.0
        %963 = vmatprep.mubr.f32.mxu0 0.0
        %v964 = vand.u32 %v283, 4294901760
        %965 = vmatmul.mubr.f32.gmra.mrb[0].mxu0 %v964
        %v966 = vpop.f32.mrb[0].mxu0
        %v967 = vadd.f32 %v862, %v966
        %v968 = vpop.f32.mrb[0].mxu0
        %969 = vmatprep.mubr.f32.mxu0 0.0
        %v970 = vand.u32 %v286, 4294901760
        %971 = vmatmul.mubr.f32.gmra.mrb[0].mxu0 %v970
        %v972 = vpop.f32.mrb[0].mxu0
        %v973 = vadd.f32 %v868, %v972
        %v974 = vpop.f32.mrb[0].mxu0
        %975 = vmatprep.mubr.f32.mxu0 0.0
        %v976 = vand.u32 %v289, 4294901760
        %977 = vmatmul.mubr.f32.gmra.mrb[0].mxu0 %v976
        %v978 = vpop.f32.mrb[0].mxu0
        %v979 = vadd.f32 %v874, %v978
        %v980 = vpop.f32.mrb[0].mxu0
        %981 = vmatprep.mubr.f32.mxu0 0.0
        %v982 = vand.u32 %v292, 4294901760
        %983 = vmatmul.mubr.f32.gmra.mrb[0].mxu0 %v982
        %v984 = vpop.f32.mrb[0].mxu0
        %v985 = vadd.f32 %v880, %v984
        %v986 = vpop.f32.mrb[0].mxu0
        %987 = vmatprep.mubr.f32.mxu0 0.0
        %v988 = vand.u32 %v295, 4294901760
        %989 = vmatmul.mubr.f32.gmra.mrb[0].mxu0 %v988
        %v990 = vpop.f32.mrb[0].mxu0
        %v991 = vadd.f32 %v886, %v990
        %v992 = vpop.f32.mrb[0].mxu0
        %993 = vmatprep.mubr.f32.mxu0 0.0
        %v994 = vand.u32 %v298, 4294901760
        %995 = vmatmul.mubr.f32.gmra.mrb[0].mxu0 %v994
        %v996 = vpop.f32.mrb[0].mxu0
        %v997 = vadd.f32 %v892, %v996
        %v998 = vpop.f32.mrb[0].mxu0
        %999 = vdwg.mxu0
        %vm1000 = vcmask 523264
        %1001 = vst.msk [vmem:[%s234] sm:$0xff] %vm1000, %v967
        %1002 = vst.msk [vmem:[%s234 + $0x8] sm:$0xff] %vm1000, %v973
        %1003 = vst.msk [vmem:[%s234 + $0x10] sm:$0xff] %vm1000, %v979
        %1004 = vst.msk [vmem:[%s234 + $0x18] sm:$0xff] %vm1000, %v985
        %1005 = vst.msk [vmem:[%s234 + $0x20] sm:$0xff] %vm1000, %v991
        %1006 = vst.msk [vmem:[%s234 + $0x28] sm:$0xff] %vm1000, %v997
        %s1007 = sand.u32 %s113, 1
        %s1008 = scalar_lea.sflag [#allocation4], %s1007
        %s1009 = sand.u32 %s113, 1
        %s1010 = smul.addr %s1009, 48
        %s1011 = scalar_lea.vmem [#allocation8], %s1010
        // Predicated region
        $region45: #{tpu_custom_call.1} parent=31 // pred_check
          %p1012 = pneg %p123
        $region46: #{tpu_custom_call.1} parent=31 // pred_check_branch
          %1014 = sbr.rel (%p1012) target = $region48
        $region47: #{tpu_custom_call.1} parent=31 // pred_region
          %s1016 = ssub.s32 768, 768
          %1017 = vsyncadd %s1008, %s1016
          %s1018 = smul.addr %s25, 6
          %s1019 = sadd.s32 %s26, %s1018
          %s1020 = smul.addr %s1019, 128
          %s1021 = scalar_lea.hbm %s3, %s1020
          %s1022 = sshll.u32 %s1011, 4
          %s1023 = int_to_ptr.vmem [resolvable:$true] %s1022
          %1028 = dma.vmem_to_hbm [thread:$0]  %s1023, 768, %s1021, %s1008, 128, 128, 8
        $region48: #{tpu_custom_call.1} parent=31 // pred_fallthru
          _
      $region32: #{tpu_custom_call.1} parent=5 // pred_fallthru
        _
      %p1029 = scmp.le.s32.totalorder 2, %s16
      // Predicated region
      $region49: #{tpu_custom_call.1} parent=5 // pred_check
        %p1030 = pneg %p1029
      $region50: #{tpu_custom_call.1} parent=5 // pred_check_branch
        %1032 = sbr.rel (%p1030) target = $region52
      $region51: #{tpu_custom_call.1} parent=5 // pred_region
        %s1033 = ssub.s32 %s16, 2
        // Predicated region
        $region53: #{tpu_custom_call.1} parent=51 // pred_check
          %p1034 = pneg %p129
        $region54: #{tpu_custom_call.1} parent=51 // pred_check_branch
          %1036 = sbr.rel (%p1034) target = $region56
        $region55: #{tpu_custom_call.1} parent=51 // pred_region
          %s1037 = sand.u32 %s114, 1
          %s1038 = scalar_lea.sflag [#allocation4], %s1037
          %s1039 = sand.u32 %s114, 1
          %s1040 = smul.addr %s1039, 48
          %s1041 = scalar_lea.vmem [#allocation8], %s1040
          %1042 = dma.done %s1038, 768
        $region56: #{tpu_custom_call.1} parent=51 // pred_fallthru
          _
      $region52: #{tpu_custom_call.1} parent=5 // pred_fallthru
        _
    $region6: #{tpu_custom_call.1} parent=1 // loop_footer
      %s20 = sadd.s32 1, %s16
    $region7: #{tpu_custom_call.1} parent=1 // loop_footer_branch
      %15 = sbr.rel target = $region3
    $region8: #{tpu_custom_call.1} parent=1 // loop_exit
      _
    %1043 = vsyncpa [#allocation3], 1
    %s1044 = scalar_lea.sflag [#allocation3], 1
    %1045 = vsyncpa %s1044, 1
    %1046 = vsyncpa [#allocation6], 1
    %1047 = vsyncpa [#allocation4], 1
    %s1048 = scalar_lea.sflag [#allocation4], 1
    %1049 = vsyncpa %s1048, 1

</llo_original>
